<compile_context>
chip_gen: v7x
topology: tpu7x:2x2x1
jax: 0.10.0
libtpu: 0.0.40
codegen_flags: <defaults>
</compile_context>

<pallas_src>
import jax
import jax.numpy as jnp
from jax.experimental import pallas as pl
from jax.experimental.pallas import tpu as pltpu


def _round_up(x, m):
    return (x + m - 1) // m * m


def _patch_embed_kernel(x_ref, w_ref, b_ref, o_ref):
    # One MXU matmul per (tm, K) row tile against the resident (K, E) weight,
    # f32 accumulation, bias fused into the epilogue.
    acc = jnp.dot(x_ref[...], w_ref[...], preferred_element_type=jnp.float32)
    o_ref[...] = (acc + b_ref[...]).astype(o_ref.dtype)


def _choose_row_tile(M, tm_max=512, min_steps=2):
    """Row tile: multiple of 16 (sublane-aligned for f32 and bf16 blocks),
    balanced so the grid has >= min_steps steps when M is large enough (lets
    dimension_semantics=('parallel',) split work across v7x's 2 TensorCores).
    """
    if M <= 16:
        return M                                   # single full-extent block
    steps = max(min_steps, pl.cdiv(M, tm_max))
    return min(tm_max, _round_up(pl.cdiv(M, steps), 16))


def patch_embed_matmul(patches, w_flat, bias, *, out_dtype=None, tm_max=512):
    """patches: (M, K) flattened patch vectors, w_flat: (K, E), bias: (E,).

    Returns (M, E) in out_dtype (default: patches.dtype).
    """
    M, K = patches.shape
    Kw, E = w_flat.shape
    assert Kw == K
    out_dtype = patches.dtype if out_dtype is None else out_dtype

    tm = _choose_row_tile(M, tm_max=tm_max)
    grid_m = pl.cdiv(M, tm)            # ragged last block handled by Pallas masking

    bias2d = bias.astype(jnp.float32).reshape(1, E)

    # Double-buffered working set: x tile + resident weight + bias + out tile.
    isz = lambda d: jnp.dtype(d).itemsize
    vmem_need = 2 * (tm * K * isz(patches.dtype)
                     + K * E * isz(w_flat.dtype)
                     + E * 4
                     + tm * E * isz(out_dtype))
    # >=32 MiB helps v5e (16 MiB default scoped limit); cap at 48 MiB so the
    # request is also safe under v7x's 64 MiB physical VMEM.
    vmem_limit = int(min(max(2 * vmem_need, 32 * 1024 * 1024), 48 * 1024 * 1024))

    return pl.pallas_call(
        _patch_embed_kernel,
        out_shape=jax.ShapeDtypeStruct((M, E), out_dtype),
        grid_spec=pltpu.PrefetchScalarGridSpec(
            num_scalar_prefetch=0,
            grid=(grid_m,),
            in_specs=[
                pl.BlockSpec((tm, K), lambda m: (m, 0)),   # row tile of patches
                pl.BlockSpec((K, E), lambda m: (0, 0)),    # resident weight
                pl.BlockSpec((1, E), lambda m: (0, 0)),    # resident bias
            ],
            out_specs=pl.BlockSpec((tm, E), lambda m: (m, 0)),
        ),
        compiler_params=pltpu.CompilerParams(
            dimension_semantics=("parallel",),
            vmem_limit_bytes=vmem_limit,
        ),
    )(patches, w_flat, bias2d)


def _extract_patches(x, *, patch_size, tubelet_size):
    """NCTHW -> (B, Tp*Hp*Wp, K) flattened patches, K ordered (C, t, ph, pw)."""
    B, C, T, H, W = x.shape
    ph, pw = patch_size
    t = tubelet_size
    Tp, Hp, Wp = T // t, H // ph, W // pw
    xp = x.reshape(B, C, Tp, t, Hp, ph, Wp, pw)
    # (B, Tp, Hp, Wp, C, t, ph, pw)
    xp = jnp.transpose(xp, (0, 2, 4, 6, 1, 3, 5, 7))
    K = C * t * ph * pw
    N = Tp * Hp * Wp
    return xp.reshape(B, N, K), N, K


def patch_embed_forward(x, weight, bias, *, patch_size, tubelet_size,
                        compute_dtype=jnp.bfloat16, out_dtype=None):
    """Equivalent of PatchEmbed.forward.

    x:      (B, C, T, H, W)          (NCTHW, like PyTorch)
    weight: (E, C, t, ph, pw)        (PyTorch Conv3d weight layout)
    bias:   (E,)
    returns (B, N, E) in out_dtype (default x.dtype).
    compute_dtype=jnp.float32 gives closer parity with an f32 Conv3d (slower).
    """
    B = x.shape[0]
    E = weight.shape[0]
    out_dtype = x.dtype if out_dtype is None else out_dtype

    # Cast to the MXU dtype *before* extraction so the convert fuses with the
    # transpose and the extraction pass writes compute_dtype, not f32.
    xc = x.astype(compute_dtype)
    patches, N, K = _extract_patches(
        xc, patch_size=patch_size, tubelet_size=tubelet_size)
    patches = patches.reshape(B * N, K)

    # Flatten conv weight to (K, E) matching patch-vector ordering (C,t,ph,pw).
    w_flat = weight.reshape(E, K).T.astype(compute_dtype)

    out = patch_embed_matmul(patches, w_flat, bias, out_dtype=out_dtype)
    return out.reshape(B, N, E)


def _reference_forward_f32(x, weight, bias, *, patch_size, tubelet_size):
    """Pure-JAX f32 reference (strided Conv3d == einsum over patches)."""
    B, C, T, H, W = x.shape
    E = weight.shape[0]
    ph, pw = patch_size
    t = tubelet_size
    Tp, Hp, Wp = T // t, H // ph, W // pw
    xp = x.reshape(B, C, Tp, t, Hp, ph, Wp, pw)
    xp = jnp.transpose(xp, (0, 2, 4, 6, 1, 3, 5, 7))  # B,Tp,Hp,Wp,C,t,ph,pw
    out = jnp.einsum("bnmlcdhw,ecdhw->bnmle", xp, weight,
                     preferred_element_type=jnp.float32) + bias
    return out.reshape(B, Tp * Hp * Wp, E)


def _reference_forward_bf16(x, weight, bias, *, patch_size, tubelet_size):
    """Reference with the same bf16-input / f32-accumulate recipe as the kernel."""
    B = x.shape[0]
    E = weight.shape[0]
    patches, N, K = _extract_patches(
        x, patch_size=patch_size, tubelet_size=tubelet_size)
    p = patches.reshape(B * N, K).astype(jnp.bfloat16)
    w = weight.reshape(E, K).T.astype(jnp.bfloat16)
    out = jnp.dot(p, w, preferred_element_type=jnp.float32) + bias.astype(jnp.float32)
    return out.reshape(B, N, E).astype(x.dtype)


if __name__ == "__main__":
    # Small, self-consistent config:
    #   img_size=16, patch_size=8, in_chans=3, embed_dim=32,
    #   num_frames=8, tubelet_size=2  -> N = 4*2*2 = 16, M = B*N = 32 (2 tiles)
    B, C, T, H, W = 2, 3, 8, 16, 16
    E = 32
    patch_size = (8, 8)
    tubelet_size = 2

    key = jax.random.PRNGKey(0)
    kx, kw, kb = jax.random.split(key, 3)
    x = jax.random.normal(kx, (B, C, T, H, W), dtype=jnp.float32)
    weight = jax.random.normal(
        kw, (E, C, tubelet_size, patch_size[0], patch_size[1]), dtype=jnp.float32
    ) * 0.02
    bias = jax.random.normal(kb, (E,), dtype=jnp.float32) * 0.02

    out = patch_embed_forward(
        x, weight, bias, patch_size=patch_size, tubelet_size=tubelet_size
    )
    out = jax.block_until_ready(out)

    N = (T // tubelet_size) * (H // patch_size[0]) * (W // patch_size[1])
    assert out.shape == (B, N, E) and out.dtype == x.dtype

    # Tight check against a reference that uses the identical bf16/f32 recipe.
    ref_bf16 = _reference_forward_bf16(
        x, weight, bias, patch_size=patch_size, tubelet_size=tubelet_size
    )
    assert jnp.allclose(out, ref_bf16, atol=1e-3, rtol=1e-3), "mismatch vs bf16 ref"

    # Semantic check against the full-f32 Conv3d-equivalent reference
    # (looser tolerance accounts for bf16 input rounding).
    ref_f32 = _reference_forward_f32(
        x, weight, bias, patch_size=patch_size, tubelet_size=tubelet_size
    )
    assert jnp.allclose(out, ref_f32, atol=2e-2, rtol=2e-2), "mismatch vs f32 ref"

    # bf16-output variant (halves the kernel's dominant HBM store stream).
    out_bf16 = jax.block_until_ready(patch_embed_forward(
        x, weight, bias, patch_size=patch_size, tubelet_size=tubelet_size,
        out_dtype=jnp.bfloat16))
    assert out_bf16.shape == (B, N, E) and out_bf16.dtype == jnp.bfloat16
    assert jnp.allclose(out_bf16.astype(jnp.float32), ref_f32,
                        atol=3e-2, rtol=3e-2), "mismatch vs f32 ref (bf16 out)"

    print("KERNEL_OK")
</pallas_src>

<mosaic_0001>
module attributes {stable_mosaic.version = 11 : i64} {
  func.func @_patch_embed_kernel(%arg0: i32, %arg1: memref<16x384xbf16, #tpu.memory_space<vmem>>, %arg2: memref<384x32xbf16, #tpu.memory_space<vmem>>, %arg3: memref<1x32xf32, #tpu.memory_space<vmem>>, %arg4: memref<16x32xf32, #tpu.memory_space<vmem>>) attributes {dimension_semantics = [#tpu.dimension_semantics<parallel>], iteration_bounds = array<i64: 2>, scalar_prefetch = 0 : i64, scratch_operands = 0 : i64, tpu.core_type = #tpu.core_type<tc>, window_params = [{transform_indices = @transform_0, window_bounds = array<i64: 16, 384>}, {pipeline_mode = #tpu.pipeline_mode<synchronous>, transform_indices = @transform_1, window_bounds = array<i64: 384, 32>}, {pipeline_mode = #tpu.pipeline_mode<synchronous>, transform_indices = @transform_2, window_bounds = array<i64: 1, 32>}, {transform_indices = @transform_3, window_bounds = array<i64: 16, 32>}]} {
    %c0 = arith.constant 0 : index
    %c0_0 = arith.constant 0 : index
    %0 = vector.load %arg1[%c0, %c0_0] : memref<16x384xbf16, #tpu.memory_space<vmem>>, vector<16x384xbf16>
    %c0_1 = arith.constant 0 : index
    %c0_2 = arith.constant 0 : index
    %1 = vector.load %arg2[%c0_1, %c0_2] : memref<384x32xbf16, #tpu.memory_space<vmem>>, vector<384x32xbf16>
    %cst = arith.constant dense<0.000000e+00> : vector<16x32xf32>
    %2 = tpu.matmul %0, %1, %cst {dimension_numbers = #tpu.dot_dimension_numbers<[1], [0], [0], [1], [0, 0, 1, 1], [], []>} : vector<16x384xbf16>, vector<384x32xbf16>, vector<16x32xf32> -> vector<16x32xf32>
    %c0_3 = arith.constant 0 : index
    %c0_4 = arith.constant 0 : index
    %3 = vector.load %arg3[%c0_3, %c0_4] : memref<1x32xf32, #tpu.memory_space<vmem>>, vector<1x32xf32>
    %4 = vector.broadcast %3 : vector<1x32xf32> to vector<16x32xf32>
    %5 = arith.addf %2, %4 : vector<16x32xf32>
    %c0_5 = arith.constant 0 : index
    %c0_6 = arith.constant 0 : index
    %6 = vector.load %arg4[%c0_5, %c0_6] : memref<16x32xf32, #tpu.memory_space<vmem>>, vector<16x32xf32>
    tpu.vector_store %arg4[%c0_5, %c0_6], %5 {strides = array<i32>} : memref<16x32xf32, #tpu.memory_space<vmem>>, vector<16x32xf32>,
    return
  }
  func.func @transform_0(%arg0: i32) -> (i32, i32) {
    %c0_i32 = arith.constant 0 : i32
    %c0_i32_0 = arith.constant 0 : i32
    return %arg0, %c0_i32 : i32, i32
  }
  func.func @transform_1(%arg0: i32) -> (i32, i32) {
    %c0_i32 = arith.constant 0 : i32
    %c0_i32_0 = arith.constant 0 : i32
    %c0_i32_1 = arith.constant 0 : i32
    return %c0_i32, %c0_i32_0 : i32, i32
  }
  func.func @transform_2(%arg0: i32) -> (i32, i32) {
    %c0_i32 = arith.constant 0 : i32
    %c0_i32_0 = arith.constant 0 : i32
    %c0_i32_1 = arith.constant 0 : i32
    return %c0_i32, %c0_i32_0 : i32, i32
  }
  func.func @transform_3(%arg0: i32) -> (i32, i32) {
    %c0_i32 = arith.constant 0 : i32
    %c0_i32_0 = arith.constant 0 : i32
    return %arg0, %c0_i32 : i32, i32
  }
}

</mosaic_0001>

<llo_original>
// kernel: tpu_custom_call.1
$region0: #{tpu_custom_call.1}
  #allocation0 [shape = 'u32[]', space=smem, size = 0x4, offset = 0x4, fixed_abs, tag = 'smem constant byte address 0x4 - core index']
  #allocation1 [shape = 'u32[144,128]{1,0:T(1,128)}', space=vmem, size = 0x12000, scoped, tag = 'internal scratch']
  %s0 = inlined_call_operand.vmem [shape: bf16[32,384], index: 0, kind: input, shape index: {}]
  %s1 = inlined_call_operand.vmem [shape: bf16[384,32], index: 1, kind: input, shape index: {}]
  %s2 = inlined_call_operand.vmem [shape: f32[1,32], index: 2, kind: input, shape index: {}]
  %s3 = inlined_call_operand.hbm [shape: f32[32,32], index: 3, kind: output, shape index: {}]
  %s4 = sld [smem:[#allocation0]]
  $region45: #{tpu_custom_call.1} parent=0
    _
  %s6 = ssub.s32 1, %s4
  %s7 = scalar_select 0, %s6, %s4
  $region1: #{tpu_custom_call.1} parent=0
    #allocation2 [shape = 'u8[16384]{0}', space=vmem, size = 0x4000, scoped, tag = 'output window, operand 0']
    #allocation3 [shape = 's32[2]{0}', space=sflag, size = 0x8, scoped, tag = 'scoped memory for tpu_custom_call.1']
    %8 = vsyncpa [#allocation3], 0
    %s9 = scalar_lea.sflag [#allocation3], 1
    %10 = vsyncpa %s9, 0
    loop: start=0, step=1, limit=4
    $region2: #{tpu_custom_call.1} parent=1 // loop_pre_header
      _
    $region3: #{tpu_custom_call.1} parent=1 // loop_header
      %s12 = sphi 0, %s16
      %p13 = scmp.ge.s32.totalorder %s12, 4
      %s22 = sphi 0, %s24
      %s25 = sphi 0, %s22
      %s26 = sphi 0, %s25
      %s42 = sphi 0, %s26
      %s46 = sphi 0, %s46
      %s48 = sphi 0, %s46
      %s49 = sphi 0, %s48
      %s63 = sphi 0, %s49
      %s67 = sphi 0, %s67
      %s69 = sphi 0, %s67
      %s70 = sphi 0, %s69
      %s84 = sphi 0, %s70
      %s90 = sphi 0, %s92
      %s93 = sphi 0, %s90
      %s94 = sphi 0, %s93
      %s110 = sphi 0, %s94
    $region4: #{tpu_custom_call.1} parent=1 // loop_header_branch
      %15 = sbr.rel (%p13) target = $region8
    $region5: #{tpu_custom_call.1} parent=1 // loop_body
      %s17 = ssub.s32 %s12, 1
      %s18 = ssub.s32 %s12, 2
      %s19 = sadd.s32 %s12, 1
      %s20 = ssub.s32 %s12, %s19
      %p21 = scmp.eq.s32.totalorder %s20, 0
      %s23 = sadd.s32 %s22, 1
      %s24 = scalar_select %p21, %s22, %s23
      %p27 = pneg %p21
      %p28 = scmp.eq.s32.totalorder %s12, 1
      %p29 = por %p27, %p28
      %p30 = scmp.ne.s32.totalorder %s22, %s25
      %p31 = scmp.eq.s32.totalorder %s12, 0
      %p32 = por %p30, %p31
      %p33 = scmp.ne.s32.totalorder %s22, %s25
      %p34 = scmp.eq.s32.totalorder %s17, 1
      %p35 = por %p33, %p34
      %p36 = scmp.ne.s32.totalorder %s25, %s26
      %p37 = scmp.eq.s32.totalorder %s17, 0
      %p38 = por %p36, %p37
      %p39 = scmp.ne.s32.totalorder %s25, %s26
      %p40 = scmp.eq.s32.totalorder %s18, 1
      %p41 = por %p39, %p40
      %p43 = scmp.ne.s32.totalorder %s26, %s42
      %p44 = scmp.eq.s32.totalorder %s18, 0
      %p45 = por %p43, %p44
      %s47 = sadd.s32 %s46, 1
      %p50 = scmp.eq.s32.totalorder %s12, 1
      %p51 = scmp.ne.s32.totalorder %s46, %s48
      %p52 = scmp.eq.s32.totalorder %s12, 0
      %p53 = por %p51, %p52
      %p54 = scmp.ne.s32.totalorder %s46, %s48
      %p55 = scmp.eq.s32.totalorder %s17, 1
      %p56 = por %p54, %p55
      %p57 = scmp.ne.s32.totalorder %s48, %s49
      %p58 = scmp.eq.s32.totalorder %s17, 0
      %p59 = por %p57, %p58
      %p60 = scmp.ne.s32.totalorder %s48, %s49
      %p61 = scmp.eq.s32.totalorder %s18, 1
      %p62 = por %p60, %p61
      %p64 = scmp.ne.s32.totalorder %s49, %s63
      %p65 = scmp.eq.s32.totalorder %s18, 0
      %p66 = por %p64, %p65
      %s68 = sadd.s32 %s67, 1
      %p71 = scmp.eq.s32.totalorder %s12, 1
      %p72 = scmp.ne.s32.totalorder %s67, %s69
      %p73 = scmp.eq.s32.totalorder %s12, 0
      %p74 = por %p72, %p73
      %p75 = scmp.ne.s32.totalorder %s67, %s69
      %p76 = scmp.eq.s32.totalorder %s17, 1
      %p77 = por %p75, %p76
      %p78 = scmp.ne.s32.totalorder %s69, %s70
      %p79 = scmp.eq.s32.totalorder %s17, 0
      %p80 = por %p78, %p79
      %p81 = scmp.ne.s32.totalorder %s69, %s70
      %p82 = scmp.eq.s32.totalorder %s18, 1
      %p83 = por %p81, %p82
      %p85 = scmp.ne.s32.totalorder %s70, %s84
      %p86 = scmp.eq.s32.totalorder %s18, 0
      %p87 = por %p85, %p86
      %s88 = ssub.s32 %s12, %s19
      %p89 = scmp.eq.s32.totalorder %s88, 0
      %s91 = sadd.s32 %s90, 1
      %s92 = scalar_select %p89, %s90, %s91
      %p95 = pneg %p89
      %p96 = scmp.eq.s32.totalorder %s12, 1
      %p97 = por %p95, %p96
      %p98 = scmp.ne.s32.totalorder %s90, %s93
      %p99 = scmp.eq.s32.totalorder %s12, 0
      %p100 = por %p98, %p99
      %p101 = scmp.ne.s32.totalorder %s90, %s93
      %p102 = scmp.eq.s32.totalorder %s17, 1
      %p103 = por %p101, %p102
      %p104 = scmp.ne.s32.totalorder %s93, %s94
      %p105 = scmp.eq.s32.totalorder %s17, 0
      %p106 = por %p104, %p105
      %p107 = scmp.ne.s32.totalorder %s93, %s94
      %p108 = scmp.eq.s32.totalorder %s18, 1
      %p109 = por %p107, %p108
      %p111 = scmp.ne.s32.totalorder %s94, %s110
      %p112 = scmp.eq.s32.totalorder %s18, 0
      %p113 = por %p111, %p112
      %p114 = scmp.le.s32.totalorder 1, %s12
      %p115 = scmp.lt.s32.totalorder %s12, 3
      %p116 = pnand %p114, %p115
      %p117 = pneg %p116
      // Predicated region
      $region9: #{tpu_custom_call.1} parent=5 // pred_check
        _
      $region10: #{tpu_custom_call.1} parent=5 // pred_check_branch
        %119 = sbr.rel (%p116) target = $region12
      $region11: #{tpu_custom_call.1} parent=5 // pred_region
        %s120 = ssub.s32 %s12, 1
        // Predicated region
        $region13: #{tpu_custom_call.1} parent=11 // pred_check
          %p121 = pneg %p59
        $region14: #{tpu_custom_call.1} parent=11 // pred_check_branch
          %123 = sbr.rel (%p121) target = $region16
        $region15: #{tpu_custom_call.1} parent=11 // pred_region
          _
        $region16: #{tpu_custom_call.1} parent=11 // pred_fallthru
          _
        // Predicated region
        $region17: #{tpu_custom_call.1} parent=11 // pred_check
          %p124 = pneg %p80
        $region18: #{tpu_custom_call.1} parent=11 // pred_check_branch
          %126 = sbr.rel (%p124) target = $region20
        $region19: #{tpu_custom_call.1} parent=11 // pred_region
          _
        $region20: #{tpu_custom_call.1} parent=11 // pred_fallthru
          _
      $region12: #{tpu_custom_call.1} parent=5 // pred_fallthru
        _
      %p127 = scmp.lt.s32.totalorder %s12, 2
      // Predicated region
      $region21: #{tpu_custom_call.1} parent=5 // pred_check
        %p128 = pneg %p127
      $region22: #{tpu_custom_call.1} parent=5 // pred_check_branch
        %130 = sbr.rel (%p128) target = $region24
      $region23: #{tpu_custom_call.1} parent=5 // pred_region
        // Predicated region
        $region25: #{tpu_custom_call.1} parent=23 // pred_check
          %p131 = pneg %p32
        $region26: #{tpu_custom_call.1} parent=23 // pred_check_branch
          %133 = sbr.rel (%p131) target = $region28
        $region27: #{tpu_custom_call.1} parent=23 // pred_region
          %s134 = smul.u32 2, %s12
          %p135 = scmp.lt.s32.totalorder %s134, 3
          %s136 = scalar_select %p135, %s134, 3
          %s137 = smul.addr %s136, 3
          %s138 = smul.addr %s137, 4
          %s139 = scalar_lea.vmem %s0, %s138
          %s140 = smul.u32 2, %s12
        $region28: #{tpu_custom_call.1} parent=23 // pred_fallthru
          _
      $region24: #{tpu_custom_call.1} parent=5 // pred_fallthru
        _
      %p141 = scmp.le.s32.totalorder 1, %s12
      %p142 = scmp.lt.s32.totalorder %s12, 3
      %p143 = pnand %p141, %p142
      %p144 = pneg %p143
      // Predicated region
      $region29: #{tpu_custom_call.1} parent=5 // pred_check
        _
      $region30: #{tpu_custom_call.1} parent=5 // pred_check_branch
        %146 = sbr.rel (%p143) target = $region32
      $region31: #{tpu_custom_call.1} parent=5 // pred_region
        %s147 = ssub.s32 %s12, 1
        %s148 = smul.u32 2, %s17
        %p149 = scmp.lt.s32.totalorder %s148, 3
        %s150 = scalar_select %p149, %s148, 3
        %s151 = smul.addr %s150, 3
        %s152 = smul.addr %s151, 4
        %s153 = scalar_lea.vmem %s0, %s152
        %p154 = pneg %p38
        %p155 = pneg %p35
        %p156 = pneg %p59
        %p157 = pneg %p56
        %p158 = pneg %p80
        %p159 = pneg %p77
        %p160 = pneg %p106
        %p161 = pneg %p103
        %s162 = sand.u32 %s93, 1
        %s163 = scalar_lea.sflag [#allocation3], %s162
        %s164 = sand.u32 %s93, 1
        %s165 = smul.addr %s164, 16
        %s166 = scalar_lea.vmem [#allocation2], %s165
        %s167 = smul.u32 2, %s17
        %p168 = scmp.lt.s32.totalorder %s167, 3
        %s169 = scalar_select %p168, %s167, 3
        %s170 = smul.addr %s169, 3
        %s171 = smul.addr %s170, 4
        %s172 = scalar_lea.vmem %s0, %s171
        %s173 = smul.u32 2, %s17
        %s174 = smul.u32 2, %s17
        %v176 = vld [vmem:[%s172] sm:$0xff]
        %v177 = vld [vmem:[%s172 + $0x8] sm:$0xf]
        %v178 = vld [vmem:[%s172 + $0xc] sm:$0xff]
        %v179 = vld [vmem:[%s172 + $0x14] sm:$0xf]
        %v180 = vld [vmem:[%s1] sm:$0xf]
        %v181 = vld [vmem:[%s1 + $0x4] sm:$0xf]
        %v182 = vld [vmem:[%s1 + $0x8] sm:$0xf]
        %v183 = vld [vmem:[%s1 + $0xc] sm:$0xf]
        %v184 = vld [vmem:[%s1 + $0x10] sm:$0xf]
        %v185 = vld [vmem:[%s1 + $0x14] sm:$0xf]
        %v186 = vld [vmem:[%s1 + $0x18] sm:$0xf]
        %v187 = vld [vmem:[%s1 + $0x1c] sm:$0xf]
        %v188 = vld [vmem:[%s1 + $0x20] sm:$0xf]
        %v189 = vld [vmem:[%s1 + $0x24] sm:$0xf]
        %v190 = vld [vmem:[%s1 + $0x28] sm:$0xf]
        %v191 = vld [vmem:[%s1 + $0x2c] sm:$0xf]
        %v192 = vld [vmem:[%s1 + $0x30] sm:$0xf]
        %v193 = vld [vmem:[%s1 + $0x34] sm:$0xf]
        %v194 = vld [vmem:[%s1 + $0x38] sm:$0xf]
        %v195 = vld [vmem:[%s1 + $0x3c] sm:$0xf]
        %v196 = vld [vmem:[%s1 + $0x40] sm:$0xf]
        %v197 = vld [vmem:[%s1 + $0x44] sm:$0xf]
        %v198 = vld [vmem:[%s1 + $0x48] sm:$0xf]
        %v199 = vld [vmem:[%s1 + $0x4c] sm:$0xf]
        %v200 = vld [vmem:[%s1 + $0x50] sm:$0xf]
        %v201 = vld [vmem:[%s1 + $0x54] sm:$0xf]
        %v202 = vld [vmem:[%s1 + $0x58] sm:$0xf]
        %v203 = vld [vmem:[%s1 + $0x5c] sm:$0xf]
        %v204 = vld [vmem:[%s1 + $0x60] sm:$0xf]
        %v205 = vld [vmem:[%s1 + $0x64] sm:$0xf]
        %v206 = vld [vmem:[%s1 + $0x68] sm:$0xf]
        %v207 = vld [vmem:[%s1 + $0x6c] sm:$0xf]
        %v208 = vld [vmem:[%s1 + $0x70] sm:$0xf]
        %v209 = vld [vmem:[%s1 + $0x74] sm:$0xf]
        %v210 = vld [vmem:[%s1 + $0x78] sm:$0xf]
        %v211 = vld [vmem:[%s1 + $0x7c] sm:$0xf]
        %v212 = vld [vmem:[%s1 + $0x80] sm:$0xf]
        %v213 = vld [vmem:[%s1 + $0x84] sm:$0xf]
        %v214 = vld [vmem:[%s1 + $0x88] sm:$0xf]
        %v215 = vld [vmem:[%s1 + $0x8c] sm:$0xf]
        %v216 = vld [vmem:[%s1 + $0x90] sm:$0xf]
        %v217 = vld [vmem:[%s1 + $0x94] sm:$0xf]
        %v218 = vld [vmem:[%s1 + $0x98] sm:$0xf]
        %v219 = vld [vmem:[%s1 + $0x9c] sm:$0xf]
        %v220 = vld [vmem:[%s1 + $0xa0] sm:$0xf]
        %v221 = vld [vmem:[%s1 + $0xa4] sm:$0xf]
        %v222 = vld [vmem:[%s1 + $0xa8] sm:$0xf]
        %v223 = vld [vmem:[%s1 + $0xac] sm:$0xf]
        %v224 = vld [vmem:[%s1 + $0xb0] sm:$0xf]
        %v225 = vld [vmem:[%s1 + $0xb4] sm:$0xf]
        %v226 = vld [vmem:[%s1 + $0xb8] sm:$0xf]
        %v227 = vld [vmem:[%s1 + $0xbc] sm:$0xf]
        %v228 = vld [vmem:[%s2] sm:$0x1]
        %v230 = vlaneseq
        %v231 = vshrl.u32 %v230, 7
        %v232 = vsub.s32 0, %v231
        %v233 = vrot.slane %v228, %v232
        %v239 = vunpack.c.l.b16 %v176
        %v240 = vunpack.c.h.b16 %v176
        %v241 = vunpack.c.l.b16 %v177
        %v242 = vunpack.c.l.b16 %v178
        %v243 = vunpack.c.h.b16 %v178
        %v244 = vunpack.c.l.b16 %v179
        %v245 = vpack.c.b16 %v242, %v239
        %v246 = vpack.c.b16 %v243, %v240
        %v247 = vpack.c.b16 %v244, %v241
        %v299 = vunpack.c.l.b16 %v180
        %v300 = vunpack.c.l.b16 %v181
        %v301 = vunpack.c.l.b16 %v182
        %v302 = vunpack.c.l.b16 %v183
        %v303 = vunpack.c.l.b16 %v184
        %v304 = vunpack.c.l.b16 %v185
        %v305 = vunpack.c.l.b16 %v186
        %v306 = vunpack.c.l.b16 %v187
        %v307 = vunpack.c.l.b16 %v188
        %v308 = vunpack.c.l.b16 %v189
        %v309 = vunpack.c.l.b16 %v190
        %v310 = vunpack.c.l.b16 %v191
        %v311 = vunpack.c.l.b16 %v192
        %v312 = vunpack.c.l.b16 %v193
        %v313 = vunpack.c.l.b16 %v194
        %v314 = vunpack.c.l.b16 %v195
        %v315 = vunpack.c.l.b16 %v196
        %v316 = vunpack.c.l.b16 %v197
        %v317 = vunpack.c.l.b16 %v198
        %v318 = vunpack.c.l.b16 %v199
        %v319 = vunpack.c.l.b16 %v200
        %v320 = vunpack.c.l.b16 %v201
        %v321 = vunpack.c.l.b16 %v202
        %v322 = vunpack.c.l.b16 %v203
        %v323 = vunpack.c.l.b16 %v204
        %v324 = vunpack.c.l.b16 %v205
        %v325 = vunpack.c.l.b16 %v206
        %v326 = vunpack.c.l.b16 %v207
        %v327 = vunpack.c.l.b16 %v208
        %v328 = vunpack.c.l.b16 %v209
        %v329 = vunpack.c.l.b16 %v210
        %v330 = vunpack.c.l.b16 %v211
        %v331 = vunpack.c.l.b16 %v212
        %v332 = vunpack.c.l.b16 %v213
        %v333 = vunpack.c.l.b16 %v214
        %v334 = vunpack.c.l.b16 %v215
        %v335 = vunpack.c.l.b16 %v216
        %v336 = vunpack.c.l.b16 %v217
        %v337 = vunpack.c.l.b16 %v218
        %v338 = vunpack.c.l.b16 %v219
        %v339 = vunpack.c.l.b16 %v220
        %v340 = vunpack.c.l.b16 %v221
        %v341 = vunpack.c.l.b16 %v222
        %v342 = vunpack.c.l.b16 %v223
        %v343 = vunpack.c.l.b16 %v224
        %v344 = vunpack.c.l.b16 %v225
        %v345 = vunpack.c.l.b16 %v226
        %v346 = vunpack.c.l.b16 %v227
        %v347 = vpack.c.b16 %v300, %v299
        %v348 = vpack.c.b16 %v302, %v301
        %v349 = vpack.c.b16 %v304, %v303
        %v350 = vpack.c.b16 %v306, %v305
        %v351 = vpack.c.b16 %v308, %v307
        %v352 = vpack.c.b16 %v310, %v309
        %v353 = vpack.c.b16 %v312, %v311
        %v354 = vpack.c.b16 %v314, %v313
        %v355 = vpack.c.b16 %v316, %v315
        %v356 = vpack.c.b16 %v318, %v317
        %v357 = vpack.c.b16 %v320, %v319
        %v358 = vpack.c.b16 %v322, %v321
        %v359 = vpack.c.b16 %v324, %v323
        %v360 = vpack.c.b16 %v326, %v325
        %v361 = vpack.c.b16 %v328, %v327
        %v362 = vpack.c.b16 %v330, %v329
        %v363 = vpack.c.b16 %v332, %v331
        %v364 = vpack.c.b16 %v334, %v333
        %v365 = vpack.c.b16 %v336, %v335
        %v366 = vpack.c.b16 %v338, %v337
        %v367 = vpack.c.b16 %v340, %v339
        %v368 = vpack.c.b16 %v342, %v341
        %v369 = vpack.c.b16 %v344, %v343
        %v370 = vpack.c.b16 %v346, %v345
        %395 = vmatprep.subr.bf16.mxu0 0
        %396 = vmatpush1.bf16.msra.mxu0 %v347
        %397 = vmatprep.subr.bf16.mxu0 0
        %398 = vmatpush1.bf16.msra.mxu0 %v348
        %399 = vmatprep.subr.bf16.mxu0 0
        %400 = vmatpush1.bf16.msra.mxu0 %v349
        %401 = vmatprep.subr.bf16.mxu0 0
        %402 = vmatpush1.bf16.msra.mxu0 %v350
        %403 = vmatprep.subr.bf16.mxu0 0
        %404 = vmatpush1.bf16.msra.mxu0 %v351
        %405 = vmatprep.subr.bf16.mxu0 0
        %406 = vmatpush1.bf16.msra.mxu0 %v352
        %407 = vmatprep.subr.bf16.mxu0 0
        %408 = vmatpush1.bf16.msra.mxu0 %v353
        %409 = vmatprep.subr.bf16.mxu0 0
        %410 = vmatpush1.bf16.msra.mxu0 %v354
        %411 = vmatprep.subr.bf16.mxu0 0
        %412 = vmatpush1.bf16.msra.mxu0 %v355
        %413 = vmatprep.subr.bf16.mxu0 0
        %414 = vmatpush1.bf16.msra.mxu0 %v356
        %415 = vmatprep.subr.bf16.mxu0 0
        %416 = vmatpush1.bf16.msra.mxu0 %v357
        %417 = vmatprep.subr.bf16.mxu0 0
        %418 = vmatpush1.bf16.msra.mxu0 %v358
        %419 = vmatprep.subr.bf16.mxu0 0
        %420 = vmatpush1.bf16.msra.mxu0 %v359
        %421 = vmatprep.subr.bf16.mxu0 0
        %422 = vmatpush1.bf16.msra.mxu0 %v360
        %423 = vmatprep.subr.bf16.mxu0 0
        %424 = vmatpush1.bf16.msra.mxu0 %v361
        %425 = vmatprep.subr.bf16.mxu0 0
        %426 = vmatpush1.bf16.msra.mxu0 %v362
        %427 = vmatprep.mubr.bf16.mxu0 %v246
        %428 = vmatmul.mubr.bf16.gmra.mrb[0].mxu0 %v245
        %v429 = vpop.f32.mrb[0].mxu0
        %v430 = vadd.f32 %v233, %v429
        %v431 = vpop.f32.mrb[0].mxu0
        %v432 = vpop.f32.mrb[0].mxu0
        %v433 = vadd.f32 %v233, %v432
        %v434 = vpop.f32.mrb[0].mxu0
        %435 = vdwg.mxu0
        %436 = vmatprep.subr.bf16.mxu0 0
        %437 = vmatpush1.bf16.msra.mxu0 %v363
        %438 = vmatprep.subr.bf16.mxu0 0
        %439 = vmatpush1.bf16.msra.mxu0 %v364
        %440 = vmatprep.subr.bf16.mxu0 0
        %441 = vmatpush1.bf16.msra.mxu0 %v365
        %442 = vmatprep.subr.bf16.mxu0 0
        %443 = vmatpush1.bf16.msra.mxu0 %v366
        %444 = vmatprep.subr.bf16.mxu0 0
        %445 = vmatpush1.bf16.msra.mxu0 %v367
        %446 = vmatprep.subr.bf16.mxu0 0
        %447 = vmatpush1.bf16.msra.mxu0 %v368
        %448 = vmatprep.subr.bf16.mxu0 0
        %449 = vmatpush1.bf16.msra.mxu0 %v369
        %450 = vmatprep.subr.bf16.mxu0 0
        %451 = vmatpush1.bf16.msra.mxu0 %v370
        %452 = vmatprep.subr.bf16.mxu0 0
        %453 = vmatpush1.bf16.msra.mxu0 0
        %454 = vmatprep.subr.bf16.mxu0 0
        %455 = vmatpush1.bf16.msra.mxu0 0
        %456 = vmatprep.subr.bf16.mxu0 0
        %457 = vmatpush1.bf16.msra.mxu0 0
        %458 = vmatprep.subr.bf16.mxu0 0
        %459 = vmatpush1.bf16.msra.mxu0 0
        %460 = vmatprep.subr.bf16.mxu0 0
        %461 = vmatpush1.bf16.msra.mxu0 0
        %462 = vmatprep.subr.bf16.mxu0 0
        %463 = vmatpush1.bf16.msra.mxu0 0
        %464 = vmatprep.subr.bf16.mxu0 0
        %465 = vmatpush1.bf16.msra.mxu0 0
        %466 = vmatprep.subr.bf16.mxu0 0
        %467 = vmatpush1.bf16.msra.mxu0 0
        %468 = vmatprep.mubr.bf16.mxu0 0
        %469 = vmatmul.mubr.bf16.gmra.mrb[0].mxu0 %v247
        %v470 = vpop.f32.mrb[0].mxu0
        %v471 = vadd.f32 %v430, %v470
        %v472 = vpop.f32.mrb[0].mxu0
        %v473 = vpop.f32.mrb[0].mxu0
        %v474 = vadd.f32 %v433, %v473
        %v475 = vpop.f32.mrb[0].mxu0
        %476 = vdwg.mxu0
        %vm477 = vcmask 261120
        %478 = vst.msk [vmem:[%s166] sm:$0xff] %vm477, %v471
        %479 = vst.msk [vmem:[%s166 + $0x8] sm:$0xff] %vm477, %v474
        %s480 = sand.u32 %s93, 1
        %s481 = scalar_lea.sflag [#allocation3], %s480
        %s482 = sand.u32 %s93, 1
        %s483 = smul.addr %s482, 16
        %s484 = scalar_lea.vmem [#allocation2], %s483
        // Predicated region
        $region33: #{tpu_custom_call.1} parent=31 // pred_check
          %p485 = pneg %p103
        $region34: #{tpu_custom_call.1} parent=31 // pred_check_branch
          %487 = sbr.rel (%p485) target = $region36
        $region35: #{tpu_custom_call.1} parent=31 // pred_region
          %s488 = smul.u32 2, %s17
          %s490 = ssub.s32 256, 256
          %491 = vsyncadd %s481, %s490
          %s492 = smul.addr %s488, 128
          %s493 = scalar_lea.hbm %s3, %s492
          %s494 = sshll.u32 %s484, 4
          %s495 = int_to_ptr.vmem [resolvable:$true] %s494
          %500 = dma.vmem_to_hbm [thread:$0]  %s495, 256, %s493, %s481, 128, 128, 8
        $region36: #{tpu_custom_call.1} parent=31 // pred_fallthru
          _
      $region32: #{tpu_custom_call.1} parent=5 // pred_fallthru
        _
      %p501 = scmp.le.s32.totalorder 2, %s12
      // Predicated region
      $region37: #{tpu_custom_call.1} parent=5 // pred_check
        %p502 = pneg %p501
      $region38: #{tpu_custom_call.1} parent=5 // pred_check_branch
        %504 = sbr.rel (%p502) target = $region40
      $region39: #{tpu_custom_call.1} parent=5 // pred_region
        %s505 = ssub.s32 %s12, 2
        // Predicated region
        $region41: #{tpu_custom_call.1} parent=39 // pred_check
          %p506 = pneg %p109
        $region42: #{tpu_custom_call.1} parent=39 // pred_check_branch
          %508 = sbr.rel (%p506) target = $region44
        $region43: #{tpu_custom_call.1} parent=39 // pred_region
          %s509 = sand.u32 %s94, 1
          %s510 = scalar_lea.sflag [#allocation3], %s509
          %s511 = sand.u32 %s94, 1
          %s512 = smul.addr %s511, 16
          %s513 = scalar_lea.vmem [#allocation2], %s512
          %514 = dma.done %s510, 256
        $region44: #{tpu_custom_call.1} parent=39 // pred_fallthru
          _
      $region40: #{tpu_custom_call.1} parent=5 // pred_fallthru
        _
    $region6: #{tpu_custom_call.1} parent=1 // loop_footer
      %s16 = sadd.s32 1, %s12
    $region7: #{tpu_custom_call.1} parent=1 // loop_footer_branch
      %11 = sbr.rel target = $region3
    $region8: #{tpu_custom_call.1} parent=1 // loop_exit
      _
    %515 = vsyncpa [#allocation3], 1
    %s516 = scalar_lea.sflag [#allocation3], 1
    %517 = vsyncpa %s516, 1

</llo_original>
